<compile_context>
chip_gen: v7x
topology: tpu7x:2x2x1
jax: 0.10.0
libtpu: 0.0.40
codegen_flags: <defaults>
</compile_context>

<pallas_src>
import functools

import jax
import jax.numpy as jnp
from jax.experimental import pallas as pl
from jax.experimental.pallas import tpu as pltpu

_LANES = 128  # lane width


def _cos_kernel(x_ref, o_ref):
    # Elementwise cosine on the whole VMEM tile. Compute in f32 (v5e has no
    # bf16 VPU/EUP path); for f32 inputs the casts are no-ops.
    o_ref[...] = jnp.cos(x_ref[...].astype(jnp.float32)).astype(o_ref.dtype)


@functools.lru_cache(maxsize=1)
def _vmem_capacity_bytes() -> int:
    try:
        return int(pltpu.get_tpu_info().vmem_capacity_bytes)
    except Exception:
        return 64 << 20  # conservative fallback (v7x per-TC VMEM)


def _round_down(x: int, m: int) -> int:
    return (x // m) * m


def _sublane_multiple(itemsize: int) -> int:
    # f32 -> 8, bf16/f16 -> 16, int8/fp8 -> 32 (packed-sublane tiling).
    return {4: 8, 2: 16, 1: 32}.get(itemsize, 8)


def _choose_cols(n: int, sublane: int) -> int:
    # Lane-dense trailing dim (multiple of 128). Prefer wide cols, but keep
    # enough rows that the grid has >= 2 blocks (both v7x TensorCores work).
    for c in (1024, 512, 256, _LANES):
        if n % c == 0 and n // c >= 2 * sublane:
            return c
    for c in (1024, 512, 256, _LANES):
        if n % c == 0:
            return c
    return _LANES  # requires a < 128-element pad on the flat array


@jax.jit
def net_cos_forward(x: jax.Array) -> jax.Array:
    """Elementwise cos as a tiled, pipelined Pallas TPU kernel."""
    orig_shape = x.shape
    dtype = x.dtype
    n = x.size
    if n == 0:
        return x
    if not jnp.issubdtype(dtype, jnp.floating):
        # Integer inputs promote to float (matches torch.cos); skip the kernel.
        return jnp.cos(x)

    itemsize = jnp.dtype(dtype).itemsize
    sublane = _sublane_multiple(itemsize)

    cols = _choose_cols(n, sublane)
    rows = pl.cdiv(n, cols)
    padded_n = rows * cols

    flat = x.reshape(-1)
    if padded_n != n:
        # Tiny pad (< cols elements); fuses under jit. Sliced off afterwards.
        flat = jnp.pad(flat, (0, padded_n - n))
    x2 = flat.reshape(rows, cols)

    # Generation-aware VMEM budget: explicit limit at half of physical VMEM
    # (capped at 64 MiB); block bytes sized so 2 in + 2 out double-buffered
    # blocks stay well inside that limit.
    vmem_limit = int(min(64 << 20, _vmem_capacity_bytes() // 2))
    target_block_bytes = int(min(4 << 20, vmem_limit // 5))

    if rows <= sublane:
        # Block equals the full (short) row extent -> always a legal block.
        tm = rows
    else:
        tm = max(sublane,
                 _round_down(target_block_bytes // (cols * itemsize), sublane))
        # Keep at least two grid blocks so both v7x TensorCores get work.
        tm = min(tm, max(sublane, _round_down(pl.cdiv(rows, 2), sublane)))

    grid = (pl.cdiv(rows, tm),)

    out2 = pl.pallas_call(
        _cos_kernel,
        out_shape=jax.ShapeDtypeStruct((rows, cols), dtype),
        grid=grid,
        in_specs=[pl.BlockSpec((tm, cols), lambda i: (i, 0))],
        out_specs=pl.BlockSpec((tm, cols), lambda i: (i, 0)),
        compiler_params=pltpu.CompilerParams(
            dimension_semantics=("parallel",),
            vmem_limit_bytes=vmem_limit,
        ),
        cost_estimate=pl.CostEstimate(
            flops=0,
            transcendentals=padded_n,
            bytes_accessed=2 * padded_n * itemsize,
        ),
    )(x2)

    out_flat = out2.reshape(-1)
    if padded_n != n:
        out_flat = out_flat[:n]
    return out_flat.reshape(orig_shape)


if __name__ == "__main__":
    key = jax.random.PRNGKey(0)
    # NCHW tensor consistent with the PyTorch module: batch=2, channels=4, 16x16 spatial.
    x = jax.random.normal(key, (2, 4, 16, 16), dtype=jnp.float32)

    y = jax.block_until_ready(net_cos_forward(x))

    # Correctness check against plain JAX.
    ref = jnp.cos(x)
    assert y.shape == x.shape and y.dtype == x.dtype
    assert jnp.allclose(y, ref, atol=1e-6, rtol=1e-6)

    print("KERNEL_OK")
</pallas_src>

<mosaic_0001>
module attributes {stable_mosaic.version = 11 : i64} {
  func.func @_cos_kernel(%arg0: i32, %arg1: memref<8x128xf32, #tpu.memory_space<vmem>>, %arg2: memref<8x128xf32, #tpu.memory_space<vmem>>) attributes {dimension_semantics = [#tpu.dimension_semantics<parallel>], iteration_bounds = array<i64: 2>, scalar_prefetch = 0 : i64, scratch_operands = 0 : i64, tpu.core_type = #tpu.core_type<tc>, window_params = [{transform_indices = @transform_0, window_bounds = array<i64: 8, 128>}, {transform_indices = @transform_1, window_bounds = array<i64: 8, 128>}]} {
    %c0 = arith.constant 0 : index
    %c0_0 = arith.constant 0 : index
    %0 = vector.load %arg1[%c0, %c0_0] : memref<8x128xf32, #tpu.memory_space<vmem>>, vector<8x128xf32>
    %1 = math.cos %0 : vector<8x128xf32>
    %c0_1 = arith.constant 0 : index
    %c0_2 = arith.constant 0 : index
    %2 = vector.load %arg2[%c0_1, %c0_2] : memref<8x128xf32, #tpu.memory_space<vmem>>, vector<8x128xf32>
    tpu.vector_store %arg2[%c0_1, %c0_2], %1 {strides = array<i32>} : memref<8x128xf32, #tpu.memory_space<vmem>>, vector<8x128xf32>,
    return
  }
  func.func @transform_0(%arg0: i32) -> (i32, i32) {
    %c0_i32 = arith.constant 0 : i32
    %c0_i32_0 = arith.constant 0 : i32
    return %arg0, %c0_i32 : i32, i32
  }
  func.func @transform_1(%arg0: i32) -> (i32, i32) {
    %c0_i32 = arith.constant 0 : i32
    %c0_i32_0 = arith.constant 0 : i32
    return %arg0, %c0_i32 : i32, i32
  }
}

</mosaic_0001>

<llo_original>
// kernel: net_cos_forward.1
$region0: #{net_cos_forward.1}
  #allocation0 [shape = 'u32[]', space=smem, size = 0x4, offset = 0x4, fixed_abs, tag = 'smem constant byte address 0x4 - core index']
  #allocation1 [shape = 'u32[144,128]{1,0:T(1,128)}', space=vmem, size = 0x12000, scoped, tag = 'internal scratch']
  %s0 = inlined_call_operand.vmem [shape: f32[16,128], index: 0, kind: input, shape index: {}]
  %s1 = inlined_call_operand.vmem [shape: f32[16,128], index: 1, kind: output, shape index: {}]
  %s2 = sld [smem:[#allocation0]]
  $region37: #{net_cos_forward.1} parent=0
    _
  %s4 = ssub.s32 1, %s2
  %s5 = scalar_select 0, %s4, %s2
  loop: start=0, step=1, limit=4
  $region2: #{net_cos_forward.1} parent=0 // loop_pre_header
    _
  $region3: #{net_cos_forward.1} parent=0 // loop_header
    %s7 = sphi 0, %s11
    %p8 = scmp.ge.s32.totalorder %s7, 4
    %s17 = sphi 0, %s19
    %s20 = sphi 0, %s17
    %s21 = sphi 0, %s20
    %s37 = sphi 0, %s21
    %s43 = sphi 0, %s45
    %s46 = sphi 0, %s43
    %s47 = sphi 0, %s46
    %s63 = sphi 0, %s47
  $region4: #{net_cos_forward.1} parent=0 // loop_header_branch
    %10 = sbr.rel (%p8) target = $region8
  $region5: #{net_cos_forward.1} parent=0 // loop_body
    %s12 = ssub.s32 %s7, 1
    %s13 = ssub.s32 %s7, 2
    %s14 = sadd.s32 %s7, 1
    %s15 = ssub.s32 %s7, %s14
    %p16 = scmp.eq.s32.totalorder %s15, 0
    %s18 = sadd.s32 %s17, 1
    %s19 = scalar_select %p16, %s17, %s18
    %p22 = pneg %p16
    %p23 = scmp.eq.s32.totalorder %s7, 1
    %p24 = por %p22, %p23
    %p25 = scmp.ne.s32.totalorder %s17, %s20
    %p26 = scmp.eq.s32.totalorder %s7, 0
    %p27 = por %p25, %p26
    %p28 = scmp.ne.s32.totalorder %s17, %s20
    %p29 = scmp.eq.s32.totalorder %s12, 1
    %p30 = por %p28, %p29
    %p31 = scmp.ne.s32.totalorder %s20, %s21
    %p32 = scmp.eq.s32.totalorder %s12, 0
    %p33 = por %p31, %p32
    %p34 = scmp.ne.s32.totalorder %s20, %s21
    %p35 = scmp.eq.s32.totalorder %s13, 1
    %p36 = por %p34, %p35
    %p38 = scmp.ne.s32.totalorder %s21, %s37
    %p39 = scmp.eq.s32.totalorder %s13, 0
    %p40 = por %p38, %p39
    %s41 = ssub.s32 %s7, %s14
    %p42 = scmp.eq.s32.totalorder %s41, 0
    %s44 = sadd.s32 %s43, 1
    %s45 = scalar_select %p42, %s43, %s44
    %p48 = pneg %p42
    %p49 = scmp.eq.s32.totalorder %s7, 1
    %p50 = por %p48, %p49
    %p51 = scmp.ne.s32.totalorder %s43, %s46
    %p52 = scmp.eq.s32.totalorder %s7, 0
    %p53 = por %p51, %p52
    %p54 = scmp.ne.s32.totalorder %s43, %s46
    %p55 = scmp.eq.s32.totalorder %s12, 1
    %p56 = por %p54, %p55
    %p57 = scmp.ne.s32.totalorder %s46, %s47
    %p58 = scmp.eq.s32.totalorder %s12, 0
    %p59 = por %p57, %p58
    %p60 = scmp.ne.s32.totalorder %s46, %s47
    %p61 = scmp.eq.s32.totalorder %s13, 1
    %p62 = por %p60, %p61
    %p64 = scmp.ne.s32.totalorder %s47, %s63
    %p65 = scmp.eq.s32.totalorder %s13, 0
    %p66 = por %p64, %p65
    %p67 = scmp.le.s32.totalorder 1, %s7
    %p68 = scmp.lt.s32.totalorder %s7, 3
    %p69 = pnand %p67, %p68
    %p70 = pneg %p69
    // Predicated region
    $region9: #{net_cos_forward.1} parent=5 // pred_check
      _
    $region10: #{net_cos_forward.1} parent=5 // pred_check_branch
      %72 = sbr.rel (%p69) target = $region12
    $region11: #{net_cos_forward.1} parent=5 // pred_region
      %s73 = ssub.s32 %s7, 1
    $region12: #{net_cos_forward.1} parent=5 // pred_fallthru
      _
    %p74 = scmp.lt.s32.totalorder %s7, 2
    // Predicated region
    $region13: #{net_cos_forward.1} parent=5 // pred_check
      %p75 = pneg %p74
    $region14: #{net_cos_forward.1} parent=5 // pred_check_branch
      %77 = sbr.rel (%p75) target = $region16
    $region15: #{net_cos_forward.1} parent=5 // pred_region
      // Predicated region
      $region17: #{net_cos_forward.1} parent=15 // pred_check
        %p78 = pneg %p27
      $region18: #{net_cos_forward.1} parent=15 // pred_check_branch
        %80 = sbr.rel (%p78) target = $region20
      $region19: #{net_cos_forward.1} parent=15 // pred_region
        %p81 = scmp.lt.s32.totalorder %s7, 1
        %s82 = scalar_select %p81, %s7, 1
        %s83 = smul.addr %s82, 8
        %s84 = scalar_lea.vmem %s0, %s83
      $region20: #{net_cos_forward.1} parent=15 // pred_fallthru
        _
    $region16: #{net_cos_forward.1} parent=5 // pred_fallthru
      _
    %p85 = scmp.le.s32.totalorder 1, %s7
    %p86 = scmp.lt.s32.totalorder %s7, 3
    %p87 = pnand %p85, %p86
    %p88 = pneg %p87
    // Predicated region
    $region21: #{net_cos_forward.1} parent=5 // pred_check
      _
    $region22: #{net_cos_forward.1} parent=5 // pred_check_branch
      %90 = sbr.rel (%p87) target = $region24
    $region23: #{net_cos_forward.1} parent=5 // pred_region
      %s91 = ssub.s32 %s7, 1
      %p92 = scmp.lt.s32.totalorder %s12, 1
      %s93 = scalar_select %p92, %s12, 1
      %s94 = smul.addr %s93, 8
      %s95 = scalar_lea.vmem %s0, %s94
      %p96 = pneg %p33
      %p97 = pneg %p30
      %p98 = pneg %p59
      %p99 = pneg %p56
      %p100 = scmp.lt.s32.totalorder %s12, 1
      %s101 = scalar_select %p100, %s12, 1
      %s102 = smul.addr %s101, 8
      %s103 = scalar_lea.vmem %s1, %s102
      %p104 = scmp.lt.s32.totalorder %s12, 1
      %s105 = scalar_select %p104, %s12, 1
      %s106 = smul.addr %s105, 8
      %s107 = scalar_lea.vmem %s0, %s106
      %p108 = scmp.lt.s32.totalorder %s12, 1
      %s109 = scalar_select %p108, %s12, 1
      %s110 = smul.addr %s109, 8
      %s111 = scalar_lea.vmem %s1, %s110
      %v112 = vld [vmem:[%s107] sm:$0xff]
      %v113 = vand.u32 2147483647, %v112
      %vm114 = vcmp.le.f32.partialorder %v113, 0.7853982
      %vm115 = vcmp.lt.s32.totalorder %v112, 0
      %v116 = vand.u32 %v112, 2139095040
      %v117 = vshrl.u32 %v116, 23
      %v118 = vsub.s32 %v117, 127
      %v119 = vand.u32 2147483647, %v112
      %v120 = vand.u32 %v119, 8388607
      %v121 = vor.u32 %v120, 8388608
      %v122 = vsub.s32 0, %v121
      %v123 = vadd.s32 %v118, 1
      %vm124 = vcmp.gt.s32.totalorder %v123, 0
      %v125 = vsel %vm124, %v123, 0
      %v126 = vshrl.u32 %v125, 5
      %v127 = vand.u32 %v125, 31
      %v128 = vsub.s32 32, %v127
      %v129 = vshrl.u32 683565275, %v128
      %v130 = vshll.u32 683565275, %v127
      %v131 = vshrl.u32 2475754826, %v128
      %v132 = vor.u32 %v130, %v131
      %v133 = vshll.u32 2475754826, %v127
      %v134 = vshrl.u32 2131351028, %v128
      %v135 = vor.u32 %v133, %v134
      %v136 = vshll.u32 2131351028, %v127
      %v137 = vshrl.u32 2102212464, %v128
      %v138 = vor.u32 %v136, %v137
      %v139 = vshll.u32 2102212464, %v127
      %v140 = vshrl.u32 920167782, %v128
      %v141 = vor.u32 %v139, %v140
      %v142 = vshll.u32 920167782, %v127
      %v143 = vshrl.u32 1326507024, %v128
      %v144 = vor.u32 %v142, %v143
      %vm145 = vcmp.lt.s32.totalorder %v126, 1
      %vm146 = vcmp.lt.s32.totalorder %v126, 2
      %vm147 = vcmp.lt.s32.totalorder %v126, 3
      %vm148 = vcmp.lt.s32.totalorder %v126, 4
      %v149 = vsel %vm145, %v129, %v132
      %v150 = vsel %vm148, %v138, 2102212464
      %v151 = vsel %vm147, %v135, %v150
      %v152 = vsel %vm146, %v149, %v151
      %v153 = vsel %vm145, %v132, %v135
      %v154 = vsel %vm148, %v141, 920167782
      %v155 = vsel %vm147, %v138, %v154
      %v156 = vsel %vm146, %v153, %v155
      %v157 = vsel %vm145, %v135, %v138
      %v158 = vsel %vm148, %v144, 1326507024
      %v159 = vsel %vm147, %v141, %v158
      %v160 = vsel %vm146, %v157, %v159
      %v161 = vshll.u32 %v121, 8
      %v162 = vmul.u32.u64.compose %v161, %v160
      %v163 = vextract.low.u32 %v162
      %v164 = vextract.high.u32 %v162
      %v165 = vmul.u32.u64.compose %v161, %v156
      %v166 = vextract.low.u32 %v165
      %v167 = vextract.high.u32 %v165
      %v168 = vmul.u32 %v161, %v152
      %v169 = vadd.s32 %v164, %v166
      %vm170 = vc.u32 %v164, %v166
      %v171 = vadd.s32 %v167, 1
      %v172 = vsel %vm170, %v171, %v167
      %v173 = vadd.s32 %v168, %v172
      %v174 = vadd.s32 %v173, 536870912
      %v175 = vshrl.u32 %v174, 30
      %v176 = vshll.u32 %v175, 30
      %v177 = vsub.s32 %v173, %v176
      %vm178 = vcmp.lt.s32.totalorder %v177, 0
      %v179 = vsub.s32 0, %v177
      %v180 = vsel %vm178, %v179, %v177
      %v181 = vclz %v180
      %v182 = vsub.s32 %v181, 2
      %vm183 = vcmp.gt.s32.totalorder 0, %v182
      %v184 = vsel %vm183, 0, %v182
      %v185 = vsub.s32 32, %v184
      %v186 = vshll.u32 %v177, %v184
      %v187 = vshrl.u32 %v169, %v185
      %v188 = vor.u32 %v186, %v187
      %v189 = vsub.s32 4294967266, %v184
      %v190 = vadd.s32 %v189, 127
      %v191 = vshll.u32 %v190, 23
      %v192 = vor.u32 4788187, %v191
      %v193 = vand.u32 2147483647, %v192
      %v195 = vcvt.s32.f32 %v188
      %v196 = vmul.f32 %v195, %v193
      %v197 = vxor.u32 %v196, 2147483648
      %v198 = vsel %vm115, %v197, %v196
      %v199 = vsub.s32 4, %v175
      %v200 = vsel %vm115, %v199, %v175
      %v201 = vsel %vm114, %v112, %v198
      %v202 = vsel %vm114, 0, %v200
      %v203 = vcosq.f32.pop %v201
      %v204 = vsinq.f32.pop %v201
      %vm205 = vweird.f32 %v112
      %v206 = vand.u32 %v202, 3
      %vm207 = vcmp.lt.s32.totalorder %v206, 2
      %vm208 = vcmp.eq.s32.totalorder %v206, 0
      %v209 = vxor.u32 %v204, 2147483648
      %v210 = vsel %vm208, %v203, %v209
      %vm211 = vcmp.eq.s32.totalorder %v206, 2
      %v212 = vxor.u32 %v203, 2147483648
      %v213 = vsel %vm211, %v212, %v204
      %v214 = vsel %vm207, %v210, %v213
      %v215 = vsel %vm205, nan, %v214
      %216 = vst [vmem:[%s111] sm:$0xff] %v215
      %p217 = scmp.lt.s32.totalorder %s12, 1
      %s218 = scalar_select %p217, %s12, 1
      %s219 = smul.addr %s218, 8
      %s220 = scalar_lea.vmem %s1, %s219
      // Predicated region
      $region25: #{net_cos_forward.1} parent=23 // pred_check
        %p221 = pneg %p56
      $region26: #{net_cos_forward.1} parent=23 // pred_check_branch
        %223 = sbr.rel (%p221) target = $region28
      $region27: #{net_cos_forward.1} parent=23 // pred_region
        _
      $region28: #{net_cos_forward.1} parent=23 // pred_fallthru
        _
    $region24: #{net_cos_forward.1} parent=5 // pred_fallthru
      _
    %p224 = scmp.le.s32.totalorder 2, %s7
    // Predicated region
    $region29: #{net_cos_forward.1} parent=5 // pred_check
      %p225 = pneg %p224
    $region30: #{net_cos_forward.1} parent=5 // pred_check_branch
      %227 = sbr.rel (%p225) target = $region32
    $region31: #{net_cos_forward.1} parent=5 // pred_region
      %s228 = ssub.s32 %s7, 2
      // Predicated region
      $region33: #{net_cos_forward.1} parent=31 // pred_check
        %p229 = pneg %p62
      $region34: #{net_cos_forward.1} parent=31 // pred_check_branch
        %231 = sbr.rel (%p229) target = $region36
      $region35: #{net_cos_forward.1} parent=31 // pred_region
        %p232 = scmp.lt.s32.totalorder %s13, 1
        %s233 = scalar_select %p232, %s13, 1
        %s234 = smul.addr %s233, 8
        %s235 = scalar_lea.vmem %s1, %s234
      $region36: #{net_cos_forward.1} parent=31 // pred_fallthru
        _
    $region32: #{net_cos_forward.1} parent=5 // pred_fallthru
      _
  $region6: #{net_cos_forward.1} parent=0 // loop_footer
    %s11 = sadd.s32 1, %s7
  $region7: #{net_cos_forward.1} parent=0 // loop_footer_branch
    %6 = sbr.rel target = $region3
  $region8: #{net_cos_forward.1} parent=0 // loop_exit
    _

</llo_original>
